<compile_context>
chip_gen: v7x
topology: tpu7x:2x2x1
jax: 0.10.0
libtpu: 0.0.40
codegen_flags: <defaults>
</compile_context>

<pallas_src>
import jax
import jax.numpy as jnp
from jax.experimental import pallas as pl
from jax.experimental.pallas import tpu as pltpu

C_IN = 144
C_OUT = 144
KH = KW = 3
STRIDE = 3
NUM_CLASSES = 6                      # stand-in for self.heads.num_classes
K_IM2COL = C_IN * KH * KW            # 1296


# --------------------------------------------------------------------------- #
# Kernel
# --------------------------------------------------------------------------- #
def _conv_gemm_kernel(a_ref, w_ref, b_ref, o_ref):
    # a_ref: (tm, K)   bf16 im2col patches (producer may be fused into the DMA)
    # w_ref: (K, Nl)   bf16 weights, constant index_map (no re-DMA across grid)
    # b_ref: (1, Nl)   f32 bias (zero-padded lanes)
    # o_ref: (tm, Nl)  bf16 output; accumulation stays f32 on the MXU
    acc = jnp.dot(a_ref[...], w_ref[...], preferred_element_type=jnp.float32)
    o_ref[...] = (acc + b_ref[...]).astype(o_ref.dtype)


# --------------------------------------------------------------------------- #
# Tiling heuristics
# --------------------------------------------------------------------------- #
def _round_up(x, m):
    return ((x + m - 1) // m) * m


def _pick_tiles(M, target=1024):
    """Pick (tm, n_blocks).

    tm is a multiple of 16 (bf16 sublane pack). When there is enough work for
    more than one block, the block count is kept even so the two v7x
    TensorCores stay balanced (no effect on single-TC v5e/v6e)."""
    m16 = _round_up(max(M, 1), 16)
    if m16 <= 16:
        return 16, 1
    n_blocks = max(2, pl.cdiv(m16, target))
    if n_blocks % 2:
        n_blocks += 1
    tm = _round_up(pl.cdiv(m16, n_blocks), 16)
    n_blocks = pl.cdiv(m16, tm)
    if n_blocks > 1 and n_blocks % 2:
        n_blocks += 1
    return tm, n_blocks


# --------------------------------------------------------------------------- #
# One-time parameter repack (hoisted out of the per-call path)
# --------------------------------------------------------------------------- #
def prepare_conv1_params(weight, bias, n_out=None, compute_dtype=jnp.bfloat16):
    """Repack PyTorch conv1 params for the im2col GEMM.

    weight: [Cout, Cin, 3, 3] f32 (PyTorch OIHW)
    bias:   [Cout] f32
    n_out:  keep only the first n_out output channels (seg head needs
            num_classes + 1 = 7); None keeps all 144.
    Returns (w2d [K, Nl] bf16, b2d [1, Nl] f32) with Nl padded to a multiple
    of 128 for lane-dense stores; padded columns carry zero weight/bias.
    """
    w2d = weight.reshape(C_OUT, K_IM2COL)     # col order (c, kh, kw)
    b = bias
    if n_out is not None:
        w2d = w2d[:n_out]
        b = b[:n_out]
    n = w2d.shape[0]
    nl = max(128, _round_up(n, 128))
    w2d = jnp.pad(w2d.T.astype(compute_dtype), ((0, 0), (0, nl - n)))
    b2d = jnp.pad(b.reshape(1, n).astype(jnp.float32), ((0, 0), (0, nl - n)))
    return w2d, b2d


# --------------------------------------------------------------------------- #
# conv1 (144 -> Nout, k=3, stride=3) via Pallas GEMM
# --------------------------------------------------------------------------- #
def conv1_stride3_pallas(x_nchw, w2d, b2d, *, tm_target=1024,
                         compute_dtype=jnp.bfloat16, out_dtype=jnp.bfloat16):
    """x_nchw: [B, 144, H, W] f32 (H, W divisible by 3).
    Returns ([Mp, Nl] out_dtype GEMM output (channels-last), (B, Ho, Wo))."""
    B, C, H, W = x_nchw.shape
    assert C == C_IN and H % STRIDE == 0 and W % STRIDE == 0
    Ho, Wo = H // STRIDE, W // STRIDE
    K = K_IM2COL
    Nl = w2d.shape[1]
    M = B * Ho * Wo

    # im2col for non-overlapping 3x3 patches: reshape + transpose + cast.
    # With allow_input_fusion this chain is fused into the pallas operand DMA,
    # so no [M, K] intermediate needs to hit HBM.
    patches = x_nchw.reshape(B, C, Ho, KH, Wo, KW)
    patches = patches.transpose(0, 2, 4, 1, 3, 5).reshape(M, K)
    patches = patches.astype(compute_dtype)

    tm, n_blocks = _pick_tiles(M, tm_target)
    Mp = tm * n_blocks
    if Mp != M:
        patches = jnp.pad(patches, ((0, Mp - M), (0, 0)))

    bytes_accessed = (Mp * K * jnp.dtype(compute_dtype).itemsize
                      + K * Nl * jnp.dtype(compute_dtype).itemsize
                      + Nl * 4
                      + Mp * Nl * jnp.dtype(out_dtype).itemsize)

    out = pl.pallas_call(
        _conv_gemm_kernel,
        out_shape=jax.ShapeDtypeStruct((Mp, Nl), out_dtype),
        grid_spec=pltpu.PrefetchScalarGridSpec(
            num_scalar_prefetch=0,
            grid=(n_blocks,),
            in_specs=[
                pl.BlockSpec((tm, K), lambda i: (i, 0)),   # patches row tile
                pl.BlockSpec((K, Nl), lambda i: (0, 0)),   # weights (constant)
                pl.BlockSpec((1, Nl), lambda i: (0, 0)),   # bias (constant)
            ],
            out_specs=pl.BlockSpec((tm, Nl), lambda i: (i, 0)),
        ),
        compiler_params=pltpu.CompilerParams(
            dimension_semantics=("parallel",),
            vmem_limit_bytes=32 * 1024 * 1024,
            allow_input_fusion=[True, False, False],
        ),
        cost_estimate=pl.CostEstimate(
            flops=2 * Mp * K * Nl,
            transcendentals=0,
            bytes_accessed=bytes_accessed,
        ),
    )(patches, w2d, b2d)

    return out, (B, Ho, Wo)


# --------------------------------------------------------------------------- #
# Detector.forward (eval mode)
# --------------------------------------------------------------------------- #
def detector_forward(x_nchw, w2d, b2d, head_type="seg"):
    """Eval-mode Detector.forward: conv1 feature path + head channel split.

    For head_type='seg', w2d/b2d should come from
    prepare_conv1_params(..., n_out=NUM_CLASSES + 1) so only the consumed
    channels are ever computed / written back."""
    out2d, (B, Ho, Wo) = conv1_stride3_pallas(x_nchw, w2d, b2d)
    out_nhwc = out2d[:B * Ho * Wo].reshape(B, Ho, Wo, -1)   # channels-last

    output = {}
    if head_type == "seg":
        output["conf"] = out_nhwc[..., NUM_CLASSES].astype(jnp.float32)
        output["cls"] = (out_nhwc[..., :NUM_CLASSES]
                         .transpose(0, 3, 1, 2).astype(jnp.float32))
        # TODO(synk): heads.get_lane_map_numpy_with_label is numpy
        # post-processing with no kernel equivalent.
    else:
        # TODO(synk): 'row' head post-processing (get_conf_and_cls_dict) is
        # not translatable; return the full NCHW feature map instead.
        output["out"] = (out_nhwc[..., :C_OUT]
                         .transpose(0, 3, 1, 2).astype(jnp.float32))
    return output


# --------------------------------------------------------------------------- #
# Reference (bf16-quantized operands, f32 accumulation — matches kernel math)
# --------------------------------------------------------------------------- #
def _reference_conv(x, w, b, compute_dtype=jnp.bfloat16):
    xq = x.astype(compute_dtype).astype(jnp.float32)
    wq = w.astype(compute_dtype).astype(jnp.float32)
    y = jax.lax.conv_general_dilated(
        xq, wq, window_strides=(STRIDE, STRIDE), padding="VALID",
        dimension_numbers=("NCHW", "OIHW", "NCHW"),
        precision=jax.lax.Precision.HIGHEST)
    return y + b.reshape(1, C_OUT, 1, 1)


if __name__ == "__main__":
    key = jax.random.PRNGKey(0)
    k_x, k_w, k_b, k_x2 = jax.random.split(key, 4)

    # Deterministic synthetic parameters (PyTorch-style init bounds).
    fan_in = C_IN * KH * KW
    bound = 1.0 / (fan_in ** 0.5)
    conv_w = jax.random.uniform(k_w, (C_OUT, C_IN, KH, KW), jnp.float32,
                                -bound, bound)
    conv_b = jax.random.uniform(k_b, (C_OUT,), jnp.float32, -bound, bound)

    # One-time parameter repack (seg head keeps only the 7 consumed channels).
    w_seg, b_seg = prepare_conv1_params(conv_w, conv_b, n_out=NUM_CLASSES + 1)
    w_all, b_all = prepare_conv1_params(conv_w, conv_b, n_out=None)

    fwd = jax.jit(detector_forward, static_argnames=("head_type",))

    # Case 1: seg head, B=2, 12x12 -> M=32, two 16-row blocks (megacore split).
    B, H, W = 2, 12, 12
    x = jax.random.normal(k_x, (B, C_IN, H, W), dtype=jnp.float32)
    res = fwd(x, w_seg, b_seg, head_type="seg")
    jax.block_until_ready(res)
    ref = _reference_conv(x, conv_w, conv_b)
    assert res["conf"].shape == (B, H // 3, W // 3)
    assert res["cls"].shape == (B, NUM_CLASSES, H // 3, W // 3)
    assert jnp.allclose(res["conf"], ref[:, NUM_CLASSES], atol=1e-2, rtol=1e-2)
    assert jnp.allclose(res["cls"], ref[:, :NUM_CLASSES], atol=1e-2, rtol=1e-2)

    # Case 2: seg head, B=1, 15x15 -> M=25; exercises row padding (Mp=32) and
    # the zero-padded weight lanes being ignored downstream.
    B2, H2, W2 = 1, 15, 15
    x2 = jax.random.normal(k_x2, (B2, C_IN, H2, W2), dtype=jnp.float32)
    res2 = fwd(x2, w_seg, b_seg, head_type="seg")
    jax.block_until_ready(res2)
    ref2 = _reference_conv(x2, conv_w, conv_b)
    assert res2["conf"].shape == (B2, H2 // 3, W2 // 3)
    assert jnp.allclose(res2["conf"], ref2[:, NUM_CLASSES], atol=1e-2, rtol=1e-2)
    assert jnp.allclose(res2["cls"], ref2[:, :NUM_CLASSES], atol=1e-2, rtol=1e-2)

    # Case 3: non-seg fallback path (full 144 channels padded to 256 lanes).
    res3 = fwd(x, w_all, b_all, head_type="row")
    jax.block_until_ready(res3)
    assert res3["out"].shape == (B, C_OUT, H // 3, W // 3)
    assert jnp.allclose(res3["out"], ref, atol=1e-2, rtol=1e-2)

    print("KERNEL_OK")
</pallas_src>

<mosaic_0001>
module attributes {stable_mosaic.version = 11 : i64} {
  func.func @_conv_gemm_kernel(%arg0: i32, %arg1: memref<16x1296xbf16, #tpu.memory_space<vmem>>, %arg2: memref<1296x128xbf16, #tpu.memory_space<vmem>>, %arg3: memref<1x128xf32, #tpu.memory_space<vmem>>, %arg4: memref<16x128xbf16, #tpu.memory_space<vmem>>) attributes {dimension_semantics = [#tpu.dimension_semantics<parallel>], iteration_bounds = array<i64: 2>, scalar_prefetch = 0 : i64, scratch_operands = 0 : i64, tpu.core_type = #tpu.core_type<tc>, window_params = [{transform_indices = @transform_0, window_bounds = array<i64: 16, 1296>}, {pipeline_mode = #tpu.pipeline_mode<synchronous>, transform_indices = @transform_1, window_bounds = array<i64: 1296, 128>}, {pipeline_mode = #tpu.pipeline_mode<synchronous>, transform_indices = @transform_2, window_bounds = array<i64: 1, 128>}, {transform_indices = @transform_3, window_bounds = array<i64: 16, 128>}]} {
    %c0 = arith.constant 0 : index
    %c0_0 = arith.constant 0 : index
    %0 = vector.load %arg1[%c0, %c0_0] : memref<16x1296xbf16, #tpu.memory_space<vmem>>, vector<16x1296xbf16>
    %c0_1 = arith.constant 0 : index
    %c0_2 = arith.constant 0 : index
    %1 = vector.load %arg2[%c0_1, %c0_2] : memref<1296x128xbf16, #tpu.memory_space<vmem>>, vector<1296x128xbf16>
    %cst = arith.constant dense<0.000000e+00> : vector<16x128xf32>
    %2 = tpu.matmul %0, %1, %cst {dimension_numbers = #tpu.dot_dimension_numbers<[1], [0], [0], [1], [0, 0, 1, 1], [], []>} : vector<16x1296xbf16>, vector<1296x128xbf16>, vector<16x128xf32> -> vector<16x128xf32>
    %c0_3 = arith.constant 0 : index
    %c0_4 = arith.constant 0 : index
    %3 = vector.load %arg3[%c0_3, %c0_4] : memref<1x128xf32, #tpu.memory_space<vmem>>, vector<1x128xf32>
    %4 = vector.broadcast %3 : vector<1x128xf32> to vector<16x128xf32>
    %5 = arith.addf %2, %4 : vector<16x128xf32>
    %6 = arith.truncf %5 : vector<16x128xf32> to vector<16x128xbf16>
    %c0_5 = arith.constant 0 : index
    %c0_6 = arith.constant 0 : index
    %7 = vector.load %arg4[%c0_5, %c0_6] : memref<16x128xbf16, #tpu.memory_space<vmem>>, vector<16x128xbf16>
    tpu.vector_store %arg4[%c0_5, %c0_6], %6 {strides = array<i32>} : memref<16x128xbf16, #tpu.memory_space<vmem>>, vector<16x128xbf16>,
    return
  }
  func.func @transform_0(%arg0: i32) -> (i32, i32) {
    %c0_i32 = arith.constant 0 : i32
    %c0_i32_0 = arith.constant 0 : i32
    return %arg0, %c0_i32 : i32, i32
  }
  func.func @transform_1(%arg0: i32) -> (i32, i32) {
    %c0_i32 = arith.constant 0 : i32
    %c0_i32_0 = arith.constant 0 : i32
    %c0_i32_1 = arith.constant 0 : i32
    return %c0_i32, %c0_i32_0 : i32, i32
  }
  func.func @transform_2(%arg0: i32) -> (i32, i32) {
    %c0_i32 = arith.constant 0 : i32
    %c0_i32_0 = arith.constant 0 : i32
    %c0_i32_1 = arith.constant 0 : i32
    return %c0_i32, %c0_i32_0 : i32, i32
  }
  func.func @transform_3(%arg0: i32) -> (i32, i32) {
    %c0_i32 = arith.constant 0 : i32
    %c0_i32_0 = arith.constant 0 : i32
    return %arg0, %c0_i32 : i32, i32
  }
}

</mosaic_0001>

<llo_original>
// kernel: detector_forward.1
$region0: #{detector_forward.1}
  #allocation0 [shape = 'u32[]', space=smem, size = 0x4, offset = 0x4, fixed_abs, tag = 'smem constant byte address 0x4 - core index']
  #allocation1 [shape = 'u32[144,128]{1,0:T(1,128)}', space=vmem, size = 0x12000, scoped, tag = 'internal scratch']
  %s0 = inlined_call_operand.vmem [shape: bf16[32,1296], index: 0, kind: input, shape index: {}]
  %s1 = inlined_call_operand.vmem [shape: bf16[1296,128], index: 1, kind: input, shape index: {}]
  %s2 = inlined_call_operand.vmem [shape: f32[1,128], index: 2, kind: input, shape index: {}]
  %s3 = inlined_call_operand.vmem [shape: bf16[32,128], index: 3, kind: output, shape index: {}]
  %s4 = sld [smem:[#allocation0]]
  $region45: #{detector_forward.1} parent=0
    _
  %s6 = ssub.s32 1, %s4
  %s7 = scalar_select 0, %s6, %s4
  loop: start=0, step=1, limit=4
  $region2: #{detector_forward.1} parent=0 // loop_pre_header
    _
  $region3: #{detector_forward.1} parent=0 // loop_header
    %s9 = sphi 0, %s13
    %p10 = scmp.ge.s32.totalorder %s9, 4
    %s19 = sphi 0, %s21
    %s22 = sphi 0, %s19
    %s23 = sphi 0, %s22
    %s39 = sphi 0, %s23
    %s43 = sphi 0, %s43
    %s45 = sphi 0, %s43
    %s46 = sphi 0, %s45
    %s60 = sphi 0, %s46
    %s64 = sphi 0, %s64
    %s66 = sphi 0, %s64
    %s67 = sphi 0, %s66
    %s81 = sphi 0, %s67
    %s87 = sphi 0, %s89
    %s90 = sphi 0, %s87
    %s91 = sphi 0, %s90
    %s107 = sphi 0, %s91
  $region4: #{detector_forward.1} parent=0 // loop_header_branch
    %12 = sbr.rel (%p10) target = $region8
  $region5: #{detector_forward.1} parent=0 // loop_body
    %s14 = ssub.s32 %s9, 1
    %s15 = ssub.s32 %s9, 2
    %s16 = sadd.s32 %s9, 1
    %s17 = ssub.s32 %s9, %s16
    %p18 = scmp.eq.s32.totalorder %s17, 0
    %s20 = sadd.s32 %s19, 1
    %s21 = scalar_select %p18, %s19, %s20
    %p24 = pneg %p18
    %p25 = scmp.eq.s32.totalorder %s9, 1
    %p26 = por %p24, %p25
    %p27 = scmp.ne.s32.totalorder %s19, %s22
    %p28 = scmp.eq.s32.totalorder %s9, 0
    %p29 = por %p27, %p28
    %p30 = scmp.ne.s32.totalorder %s19, %s22
    %p31 = scmp.eq.s32.totalorder %s14, 1
    %p32 = por %p30, %p31
    %p33 = scmp.ne.s32.totalorder %s22, %s23
    %p34 = scmp.eq.s32.totalorder %s14, 0
    %p35 = por %p33, %p34
    %p36 = scmp.ne.s32.totalorder %s22, %s23
    %p37 = scmp.eq.s32.totalorder %s15, 1
    %p38 = por %p36, %p37
    %p40 = scmp.ne.s32.totalorder %s23, %s39
    %p41 = scmp.eq.s32.totalorder %s15, 0
    %p42 = por %p40, %p41
    %s44 = sadd.s32 %s43, 1
    %p47 = scmp.eq.s32.totalorder %s9, 1
    %p48 = scmp.ne.s32.totalorder %s43, %s45
    %p49 = scmp.eq.s32.totalorder %s9, 0
    %p50 = por %p48, %p49
    %p51 = scmp.ne.s32.totalorder %s43, %s45
    %p52 = scmp.eq.s32.totalorder %s14, 1
    %p53 = por %p51, %p52
    %p54 = scmp.ne.s32.totalorder %s45, %s46
    %p55 = scmp.eq.s32.totalorder %s14, 0
    %p56 = por %p54, %p55
    %p57 = scmp.ne.s32.totalorder %s45, %s46
    %p58 = scmp.eq.s32.totalorder %s15, 1
    %p59 = por %p57, %p58
    %p61 = scmp.ne.s32.totalorder %s46, %s60
    %p62 = scmp.eq.s32.totalorder %s15, 0
    %p63 = por %p61, %p62
    %s65 = sadd.s32 %s64, 1
    %p68 = scmp.eq.s32.totalorder %s9, 1
    %p69 = scmp.ne.s32.totalorder %s64, %s66
    %p70 = scmp.eq.s32.totalorder %s9, 0
    %p71 = por %p69, %p70
    %p72 = scmp.ne.s32.totalorder %s64, %s66
    %p73 = scmp.eq.s32.totalorder %s14, 1
    %p74 = por %p72, %p73
    %p75 = scmp.ne.s32.totalorder %s66, %s67
    %p76 = scmp.eq.s32.totalorder %s14, 0
    %p77 = por %p75, %p76
    %p78 = scmp.ne.s32.totalorder %s66, %s67
    %p79 = scmp.eq.s32.totalorder %s15, 1
    %p80 = por %p78, %p79
    %p82 = scmp.ne.s32.totalorder %s67, %s81
    %p83 = scmp.eq.s32.totalorder %s15, 0
    %p84 = por %p82, %p83
    %s85 = ssub.s32 %s9, %s16
    %p86 = scmp.eq.s32.totalorder %s85, 0
    %s88 = sadd.s32 %s87, 1
    %s89 = scalar_select %p86, %s87, %s88
    %p92 = pneg %p86
    %p93 = scmp.eq.s32.totalorder %s9, 1
    %p94 = por %p92, %p93
    %p95 = scmp.ne.s32.totalorder %s87, %s90
    %p96 = scmp.eq.s32.totalorder %s9, 0
    %p97 = por %p95, %p96
    %p98 = scmp.ne.s32.totalorder %s87, %s90
    %p99 = scmp.eq.s32.totalorder %s14, 1
    %p100 = por %p98, %p99
    %p101 = scmp.ne.s32.totalorder %s90, %s91
    %p102 = scmp.eq.s32.totalorder %s14, 0
    %p103 = por %p101, %p102
    %p104 = scmp.ne.s32.totalorder %s90, %s91
    %p105 = scmp.eq.s32.totalorder %s15, 1
    %p106 = por %p104, %p105
    %p108 = scmp.ne.s32.totalorder %s91, %s107
    %p109 = scmp.eq.s32.totalorder %s15, 0
    %p110 = por %p108, %p109
    %p111 = scmp.le.s32.totalorder 1, %s9
    %p112 = scmp.lt.s32.totalorder %s9, 3
    %p113 = pnand %p111, %p112
    %p114 = pneg %p113
    // Predicated region
    $region9: #{detector_forward.1} parent=5 // pred_check
      _
    $region10: #{detector_forward.1} parent=5 // pred_check_branch
      %116 = sbr.rel (%p113) target = $region12
    $region11: #{detector_forward.1} parent=5 // pred_region
      %s117 = ssub.s32 %s9, 1
      // Predicated region
      $region13: #{detector_forward.1} parent=11 // pred_check
        %p118 = pneg %p56
      $region14: #{detector_forward.1} parent=11 // pred_check_branch
        %120 = sbr.rel (%p118) target = $region16
      $region15: #{detector_forward.1} parent=11 // pred_region
        _
      $region16: #{detector_forward.1} parent=11 // pred_fallthru
        _
      // Predicated region
      $region17: #{detector_forward.1} parent=11 // pred_check
        %p121 = pneg %p77
      $region18: #{detector_forward.1} parent=11 // pred_check_branch
        %123 = sbr.rel (%p121) target = $region20
      $region19: #{detector_forward.1} parent=11 // pred_region
        _
      $region20: #{detector_forward.1} parent=11 // pred_fallthru
        _
    $region12: #{detector_forward.1} parent=5 // pred_fallthru
      _
    %p124 = scmp.lt.s32.totalorder %s9, 2
    // Predicated region
    $region21: #{detector_forward.1} parent=5 // pred_check
      %p125 = pneg %p124
    $region22: #{detector_forward.1} parent=5 // pred_check_branch
      %127 = sbr.rel (%p125) target = $region24
    $region23: #{detector_forward.1} parent=5 // pred_region
      // Predicated region
      $region25: #{detector_forward.1} parent=23 // pred_check
        %p128 = pneg %p29
      $region26: #{detector_forward.1} parent=23 // pred_check_branch
        %130 = sbr.rel (%p128) target = $region28
      $region27: #{detector_forward.1} parent=23 // pred_region
        %s131 = smul.u32 2, %s9
        %p132 = scmp.lt.s32.totalorder %s131, 3
        %s133 = scalar_select %p132, %s131, 3
        %s134 = smul.addr %s133, 11
        %s135 = smul.addr %s134, 4
        %s136 = scalar_lea.vmem %s0, %s135
        %s137 = smul.u32 2, %s9
      $region28: #{detector_forward.1} parent=23 // pred_fallthru
        _
    $region24: #{detector_forward.1} parent=5 // pred_fallthru
      _
    %p138 = scmp.le.s32.totalorder 1, %s9
    %p139 = scmp.lt.s32.totalorder %s9, 3
    %p140 = pnand %p138, %p139
    %p141 = pneg %p140
    // Predicated region
    $region29: #{detector_forward.1} parent=5 // pred_check
      _
    $region30: #{detector_forward.1} parent=5 // pred_check_branch
      %143 = sbr.rel (%p140) target = $region32
    $region31: #{detector_forward.1} parent=5 // pred_region
      %s144 = ssub.s32 %s9, 1
      %s145 = smul.u32 2, %s14
      %p146 = scmp.lt.s32.totalorder %s145, 3
      %s147 = scalar_select %p146, %s145, 3
      %s148 = smul.addr %s147, 11
      %s149 = smul.addr %s148, 4
      %s150 = scalar_lea.vmem %s0, %s149
      %p151 = pneg %p35
      %p152 = pneg %p32
      %p153 = pneg %p56
      %p154 = pneg %p53
      %p155 = pneg %p77
      %p156 = pneg %p74
      %p157 = pneg %p103
      %p158 = pneg %p100
      %s159 = smul.u32 2, %s14
      %p160 = scmp.lt.s32.totalorder %s159, 3
      %s161 = scalar_select %p160, %s159, 3
      %s162 = smul.addr %s161, 4
      %s163 = scalar_lea.vmem %s3, %s162
      %s164 = smul.u32 2, %s14
      %p165 = scmp.lt.s32.totalorder %s164, 3
      %s166 = scalar_select %p165, %s164, 3
      %s167 = smul.addr %s166, 11
      %s168 = smul.addr %s167, 4
      %s169 = scalar_lea.vmem %s0, %s168
      %s170 = smul.u32 2, %s14
      %s171 = smul.u32 2, %s14
      %p172 = scmp.lt.s32.totalorder %s171, 3
      %s173 = scalar_select %p172, %s171, 3
      %s174 = smul.addr %s173, 4
      %s175 = scalar_lea.vmem %s3, %s174
      %s176 = smul.u32 2, %s14
      %v178 = vld [vmem:[%s169] sm:$0xff]
      %v179 = vld [vmem:[%s169 + $0x8] sm:$0xff]
      %v180 = vld [vmem:[%s169 + $0x10] sm:$0xff]
      %v181 = vld [vmem:[%s169 + $0x18] sm:$0xff]
      %v182 = vld [vmem:[%s169 + $0x20] sm:$0xff]
      %v183 = vld [vmem:[%s169 + $0x28] sm:$0xf]
      %v184 = vld [vmem:[%s169 + $0x2c] sm:$0xff]
      %v185 = vld [vmem:[%s169 + $0x34] sm:$0xff]
      %v186 = vld [vmem:[%s169 + $0x3c] sm:$0xff]
      %v187 = vld [vmem:[%s169 + $0x44] sm:$0xff]
      %v188 = vld [vmem:[%s169 + $0x4c] sm:$0xff]
      %v189 = vld [vmem:[%s169 + $0x54] sm:$0xf]
      %v190 = vld [vmem:[%s1] sm:$0xf]
      %v191 = vld [vmem:[%s1 + $0x4] sm:$0xf]
      %v192 = vld [vmem:[%s1 + $0x8] sm:$0xf]
      %v193 = vld [vmem:[%s1 + $0xc] sm:$0xf]
      %v194 = vld [vmem:[%s1 + $0x10] sm:$0xf]
      %v195 = vld [vmem:[%s1 + $0x14] sm:$0xf]
      %v196 = vld [vmem:[%s1 + $0x18] sm:$0xf]
      %v197 = vld [vmem:[%s1 + $0x1c] sm:$0xf]
      %v198 = vld [vmem:[%s1 + $0x20] sm:$0xf]
      %v199 = vld [vmem:[%s1 + $0x24] sm:$0xf]
      %v200 = vld [vmem:[%s1 + $0x28] sm:$0xf]
      %v201 = vld [vmem:[%s1 + $0x2c] sm:$0xf]
      %v202 = vld [vmem:[%s1 + $0x30] sm:$0xf]
      %v203 = vld [vmem:[%s1 + $0x34] sm:$0xf]
      %v204 = vld [vmem:[%s1 + $0x38] sm:$0xf]
      %v205 = vld [vmem:[%s1 + $0x3c] sm:$0xf]
      %v206 = vld [vmem:[%s1 + $0x40] sm:$0xf]
      %v207 = vld [vmem:[%s1 + $0x44] sm:$0xf]
      %v208 = vld [vmem:[%s1 + $0x48] sm:$0xf]
      %v209 = vld [vmem:[%s1 + $0x4c] sm:$0xf]
      %v210 = vld [vmem:[%s1 + $0x50] sm:$0xf]
      %v211 = vld [vmem:[%s1 + $0x54] sm:$0xf]
      %v212 = vld [vmem:[%s1 + $0x58] sm:$0xf]
      %v213 = vld [vmem:[%s1 + $0x5c] sm:$0xf]
      %v214 = vld [vmem:[%s1 + $0x60] sm:$0xf]
      %v215 = vld [vmem:[%s1 + $0x64] sm:$0xf]
      %v216 = vld [vmem:[%s1 + $0x68] sm:$0xf]
      %v217 = vld [vmem:[%s1 + $0x6c] sm:$0xf]
      %v218 = vld [vmem:[%s1 + $0x70] sm:$0xf]
      %v219 = vld [vmem:[%s1 + $0x74] sm:$0xf]
      %v220 = vld [vmem:[%s1 + $0x78] sm:$0xf]
      %v221 = vld [vmem:[%s1 + $0x7c] sm:$0xf]
      %v222 = vld [vmem:[%s1 + $0x80] sm:$0xf]
      %v223 = vld [vmem:[%s1 + $0x84] sm:$0xf]
      %v224 = vld [vmem:[%s1 + $0x88] sm:$0xf]
      %v225 = vld [vmem:[%s1 + $0x8c] sm:$0xf]
      %v226 = vld [vmem:[%s1 + $0x90] sm:$0xf]
      %v227 = vld [vmem:[%s1 + $0x94] sm:$0xf]
      %v228 = vld [vmem:[%s1 + $0x98] sm:$0xf]
      %v229 = vld [vmem:[%s1 + $0x9c] sm:$0xf]
      %v230 = vld [vmem:[%s1 + $0xa0] sm:$0xf]
      %v231 = vld [vmem:[%s1 + $0xa4] sm:$0xf]
      %v232 = vld [vmem:[%s1 + $0xa8] sm:$0xf]
      %v233 = vld [vmem:[%s1 + $0xac] sm:$0xf]
      %v234 = vld [vmem:[%s1 + $0xb0] sm:$0xf]
      %v235 = vld [vmem:[%s1 + $0xb4] sm:$0xf]
      %v236 = vld [vmem:[%s1 + $0xb8] sm:$0xf]
      %v237 = vld [vmem:[%s1 + $0xbc] sm:$0xf]
      %v238 = vld [vmem:[%s1 + $0xc0] sm:$0xf]
      %v239 = vld [vmem:[%s1 + $0xc4] sm:$0xf]
      %v240 = vld [vmem:[%s1 + $0xc8] sm:$0xf]
      %v241 = vld [vmem:[%s1 + $0xcc] sm:$0xf]
      %v242 = vld [vmem:[%s1 + $0xd0] sm:$0xf]
      %v243 = vld [vmem:[%s1 + $0xd4] sm:$0xf]
      %v244 = vld [vmem:[%s1 + $0xd8] sm:$0xf]
      %v245 = vld [vmem:[%s1 + $0xdc] sm:$0xf]
      %v246 = vld [vmem:[%s1 + $0xe0] sm:$0xf]
      %v247 = vld [vmem:[%s1 + $0xe4] sm:$0xf]
      %v248 = vld [vmem:[%s1 + $0xe8] sm:$0xf]
      %v249 = vld [vmem:[%s1 + $0xec] sm:$0xf]
      %v250 = vld [vmem:[%s1 + $0xf0] sm:$0xf]
      %v251 = vld [vmem:[%s1 + $0xf4] sm:$0xf]
      %v252 = vld [vmem:[%s1 + $0xf8] sm:$0xf]
      %v253 = vld [vmem:[%s1 + $0xfc] sm:$0xf]
      %v254 = vld [vmem:[%s1 + $0x100] sm:$0xf]
      %v255 = vld [vmem:[%s1 + $0x104] sm:$0xf]
      %v256 = vld [vmem:[%s1 + $0x108] sm:$0xf]
      %v257 = vld [vmem:[%s1 + $0x10c] sm:$0xf]
      %v258 = vld [vmem:[%s1 + $0x110] sm:$0xf]
      %v259 = vld [vmem:[%s1 + $0x114] sm:$0xf]
      %v260 = vld [vmem:[%s1 + $0x118] sm:$0xf]
      %v261 = vld [vmem:[%s1 + $0x11c] sm:$0xf]
      %v262 = vld [vmem:[%s1 + $0x120] sm:$0xf]
      %v263 = vld [vmem:[%s1 + $0x124] sm:$0xf]
      %v264 = vld [vmem:[%s1 + $0x128] sm:$0xf]
      %v265 = vld [vmem:[%s1 + $0x12c] sm:$0xf]
      %v266 = vld [vmem:[%s1 + $0x130] sm:$0xf]
      %v267 = vld [vmem:[%s1 + $0x134] sm:$0xf]
      %v268 = vld [vmem:[%s1 + $0x138] sm:$0xf]
      %v269 = vld [vmem:[%s1 + $0x13c] sm:$0xf]
      %v270 = vld [vmem:[%s1 + $0x140] sm:$0xf]
      %v271 = vld [vmem:[%s1 + $0x144] sm:$0xf]
      %v272 = vld [vmem:[%s1 + $0x148] sm:$0xf]
      %v273 = vld [vmem:[%s1 + $0x14c] sm:$0xf]
      %v274 = vld [vmem:[%s1 + $0x150] sm:$0xf]
      %v275 = vld [vmem:[%s1 + $0x154] sm:$0xf]
      %v276 = vld [vmem:[%s1 + $0x158] sm:$0xf]
      %v277 = vld [vmem:[%s1 + $0x15c] sm:$0xf]
      %v278 = vld [vmem:[%s1 + $0x160] sm:$0xf]
      %v279 = vld [vmem:[%s1 + $0x164] sm:$0xf]
      %v280 = vld [vmem:[%s1 + $0x168] sm:$0xf]
      %v281 = vld [vmem:[%s1 + $0x16c] sm:$0xf]
      %v282 = vld [vmem:[%s1 + $0x170] sm:$0xf]
      %v283 = vld [vmem:[%s1 + $0x174] sm:$0xf]
      %v284 = vld [vmem:[%s1 + $0x178] sm:$0xf]
      %v285 = vld [vmem:[%s1 + $0x17c] sm:$0xf]
      %v286 = vld [vmem:[%s1 + $0x180] sm:$0xf]
      %v287 = vld [vmem:[%s1 + $0x184] sm:$0xf]
      %v288 = vld [vmem:[%s1 + $0x188] sm:$0xf]
      %v289 = vld [vmem:[%s1 + $0x18c] sm:$0xf]
      %v290 = vld [vmem:[%s1 + $0x190] sm:$0xf]
      %v291 = vld [vmem:[%s1 + $0x194] sm:$0xf]
      %v292 = vld [vmem:[%s1 + $0x198] sm:$0xf]
      %v293 = vld [vmem:[%s1 + $0x19c] sm:$0xf]
      %v294 = vld [vmem:[%s1 + $0x1a0] sm:$0xf]
      %v295 = vld [vmem:[%s1 + $0x1a4] sm:$0xf]
      %v296 = vld [vmem:[%s1 + $0x1a8] sm:$0xf]
      %v297 = vld [vmem:[%s1 + $0x1ac] sm:$0xf]
      %v298 = vld [vmem:[%s1 + $0x1b0] sm:$0xf]
      %v299 = vld [vmem:[%s1 + $0x1b4] sm:$0xf]
      %v300 = vld [vmem:[%s1 + $0x1b8] sm:$0xf]
      %v301 = vld [vmem:[%s1 + $0x1bc] sm:$0xf]
      %v302 = vld [vmem:[%s1 + $0x1c0] sm:$0xf]
      %v303 = vld [vmem:[%s1 + $0x1c4] sm:$0xf]
      %v304 = vld [vmem:[%s1 + $0x1c8] sm:$0xf]
      %v305 = vld [vmem:[%s1 + $0x1cc] sm:$0xf]
      %v306 = vld [vmem:[%s1 + $0x1d0] sm:$0xf]
      %v307 = vld [vmem:[%s1 + $0x1d4] sm:$0xf]
      %v308 = vld [vmem:[%s1 + $0x1d8] sm:$0xf]
      %v309 = vld [vmem:[%s1 + $0x1dc] sm:$0xf]
      %v310 = vld [vmem:[%s1 + $0x1e0] sm:$0xf]
      %v311 = vld [vmem:[%s1 + $0x1e4] sm:$0xf]
      %v312 = vld [vmem:[%s1 + $0x1e8] sm:$0xf]
      %v313 = vld [vmem:[%s1 + $0x1ec] sm:$0xf]
      %v314 = vld [vmem:[%s1 + $0x1f0] sm:$0xf]
      %v315 = vld [vmem:[%s1 + $0x1f4] sm:$0xf]
      %v316 = vld [vmem:[%s1 + $0x1f8] sm:$0xf]
      %v317 = vld [vmem:[%s1 + $0x1fc] sm:$0xf]
      %v318 = vld [vmem:[%s1 + $0x200] sm:$0xf]
      %v319 = vld [vmem:[%s1 + $0x204] sm:$0xf]
      %v320 = vld [vmem:[%s1 + $0x208] sm:$0xf]
      %v321 = vld [vmem:[%s1 + $0x20c] sm:$0xf]
      %v322 = vld [vmem:[%s1 + $0x210] sm:$0xf]
      %v323 = vld [vmem:[%s1 + $0x214] sm:$0xf]
      %v324 = vld [vmem:[%s1 + $0x218] sm:$0xf]
      %v325 = vld [vmem:[%s1 + $0x21c] sm:$0xf]
      %v326 = vld [vmem:[%s1 + $0x220] sm:$0xf]
      %v327 = vld [vmem:[%s1 + $0x224] sm:$0xf]
      %v328 = vld [vmem:[%s1 + $0x228] sm:$0xf]
      %v329 = vld [vmem:[%s1 + $0x22c] sm:$0xf]
      %v330 = vld [vmem:[%s1 + $0x230] sm:$0xf]
      %v331 = vld [vmem:[%s1 + $0x234] sm:$0xf]
      %v332 = vld [vmem:[%s1 + $0x238] sm:$0xf]
      %v333 = vld [vmem:[%s1 + $0x23c] sm:$0xf]
      %v334 = vld [vmem:[%s1 + $0x240] sm:$0xf]
      %v335 = vld [vmem:[%s1 + $0x244] sm:$0xf]
      %v336 = vld [vmem:[%s1 + $0x248] sm:$0xf]
      %v337 = vld [vmem:[%s1 + $0x24c] sm:$0xf]
      %v338 = vld [vmem:[%s1 + $0x250] sm:$0xf]
      %v339 = vld [vmem:[%s1 + $0x254] sm:$0xf]
      %v340 = vld [vmem:[%s1 + $0x258] sm:$0xf]
      %v341 = vld [vmem:[%s1 + $0x25c] sm:$0xf]
      %v342 = vld [vmem:[%s1 + $0x260] sm:$0xf]
      %v343 = vld [vmem:[%s1 + $0x264] sm:$0xf]
      %v344 = vld [vmem:[%s1 + $0x268] sm:$0xf]
      %v345 = vld [vmem:[%s1 + $0x26c] sm:$0xf]
      %v346 = vld [vmem:[%s1 + $0x270] sm:$0xf]
      %v347 = vld [vmem:[%s1 + $0x274] sm:$0xf]
      %v348 = vld [vmem:[%s1 + $0x278] sm:$0xf]
      %v349 = vld [vmem:[%s1 + $0x27c] sm:$0xf]
      %v350 = vld [vmem:[%s1 + $0x280] sm:$0xf]
      %v351 = vld [vmem:[%s1 + $0x284] sm:$0xf]
      %v352 = vld [vmem:[%s2] sm:$0x1]
      %v354 = vlaneseq
      %v355 = vshrl.u32 %v354, 7
      %v356 = vsub.s32 0, %v355
      %v357 = vrot.slane %v352, %v356
      %v371 = vunpack.c.l.b16 %v178
      %v372 = vunpack.c.h.b16 %v178
      %v373 = vunpack.c.l.b16 %v179
      %v374 = vunpack.c.h.b16 %v179
      %v375 = vunpack.c.l.b16 %v180
      %v376 = vunpack.c.h.b16 %v180
      %v377 = vunpack.c.l.b16 %v181
      %v378 = vunpack.c.h.b16 %v181
      %v379 = vunpack.c.l.b16 %v182
      %v380 = vunpack.c.h.b16 %v182
      %v381 = vunpack.c.l.b16 %v183
      %v382 = vunpack.c.l.b16 %v184
      %v383 = vunpack.c.h.b16 %v184
      %v384 = vunpack.c.l.b16 %v185
      %v385 = vunpack.c.h.b16 %v185
      %v386 = vunpack.c.l.b16 %v186
      %v387 = vunpack.c.h.b16 %v186
      %v388 = vunpack.c.l.b16 %v187
      %v389 = vunpack.c.h.b16 %v187
      %v390 = vunpack.c.l.b16 %v188
      %v391 = vunpack.c.h.b16 %v188
      %v392 = vunpack.c.l.b16 %v189
      %v393 = vpack.c.b16 %v382, %v371
      %v394 = vpack.c.b16 %v383, %v372
      %v395 = vpack.c.b16 %v384, %v373
      %v396 = vpack.c.b16 %v385, %v374
      %v397 = vpack.c.b16 %v386, %v375
      %v398 = vpack.c.b16 %v387, %v376
      %v399 = vpack.c.b16 %v388, %v377
      %v400 = vpack.c.b16 %v389, %v378
      %v401 = vpack.c.b16 %v390, %v379
      %v402 = vpack.c.b16 %v391, %v380
      %v403 = vpack.c.b16 %v392, %v381
      %v576 = vunpack.c.l.b16 %v190
      %v577 = vunpack.c.l.b16 %v191
      %v578 = vunpack.c.l.b16 %v192
      %v579 = vunpack.c.l.b16 %v193
      %v580 = vunpack.c.l.b16 %v194
      %v581 = vunpack.c.l.b16 %v195
      %v582 = vunpack.c.l.b16 %v196
      %v583 = vunpack.c.l.b16 %v197
      %v584 = vunpack.c.l.b16 %v198
      %v585 = vunpack.c.l.b16 %v199
      %v586 = vunpack.c.l.b16 %v200
      %v587 = vunpack.c.l.b16 %v201
      %v588 = vunpack.c.l.b16 %v202
      %v589 = vunpack.c.l.b16 %v203
      %v590 = vunpack.c.l.b16 %v204
      %v591 = vunpack.c.l.b16 %v205
      %v592 = vunpack.c.l.b16 %v206
      %v593 = vunpack.c.l.b16 %v207
      %v594 = vunpack.c.l.b16 %v208
      %v595 = vunpack.c.l.b16 %v209
      %v596 = vunpack.c.l.b16 %v210
      %v597 = vunpack.c.l.b16 %v211
      %v598 = vunpack.c.l.b16 %v212
      %v599 = vunpack.c.l.b16 %v213
      %v600 = vunpack.c.l.b16 %v214
      %v601 = vunpack.c.l.b16 %v215
      %v602 = vunpack.c.l.b16 %v216
      %v603 = vunpack.c.l.b16 %v217
      %v604 = vunpack.c.l.b16 %v218
      %v605 = vunpack.c.l.b16 %v219
      %v606 = vunpack.c.l.b16 %v220
      %v607 = vunpack.c.l.b16 %v221
      %v608 = vunpack.c.l.b16 %v222
      %v609 = vunpack.c.l.b16 %v223
      %v610 = vunpack.c.l.b16 %v224
      %v611 = vunpack.c.l.b16 %v225
      %v612 = vunpack.c.l.b16 %v226
      %v613 = vunpack.c.l.b16 %v227
      %v614 = vunpack.c.l.b16 %v228
      %v615 = vunpack.c.l.b16 %v229
      %v616 = vunpack.c.l.b16 %v230
      %v617 = vunpack.c.l.b16 %v231
      %v618 = vunpack.c.l.b16 %v232
      %v619 = vunpack.c.l.b16 %v233
      %v620 = vunpack.c.l.b16 %v234
      %v621 = vunpack.c.l.b16 %v235
      %v622 = vunpack.c.l.b16 %v236
      %v623 = vunpack.c.l.b16 %v237
      %v624 = vunpack.c.l.b16 %v238
      %v625 = vunpack.c.l.b16 %v239
      %v626 = vunpack.c.l.b16 %v240
      %v627 = vunpack.c.l.b16 %v241
      %v628 = vunpack.c.l.b16 %v242
      %v629 = vunpack.c.l.b16 %v243
      %v630 = vunpack.c.l.b16 %v244
      %v631 = vunpack.c.l.b16 %v245
      %v632 = vunpack.c.l.b16 %v246
      %v633 = vunpack.c.l.b16 %v247
      %v634 = vunpack.c.l.b16 %v248
      %v635 = vunpack.c.l.b16 %v249
      %v636 = vunpack.c.l.b16 %v250
      %v637 = vunpack.c.l.b16 %v251
      %v638 = vunpack.c.l.b16 %v252
      %v639 = vunpack.c.l.b16 %v253
      %v640 = vunpack.c.l.b16 %v254
      %v641 = vunpack.c.l.b16 %v255
      %v642 = vunpack.c.l.b16 %v256
      %v643 = vunpack.c.l.b16 %v257
      %v644 = vunpack.c.l.b16 %v258
      %v645 = vunpack.c.l.b16 %v259
      %v646 = vunpack.c.l.b16 %v260
      %v647 = vunpack.c.l.b16 %v261
      %v648 = vunpack.c.l.b16 %v262
      %v649 = vunpack.c.l.b16 %v263
      %v650 = vunpack.c.l.b16 %v264
      %v651 = vunpack.c.l.b16 %v265
      %v652 = vunpack.c.l.b16 %v266
      %v653 = vunpack.c.l.b16 %v267
      %v654 = vunpack.c.l.b16 %v268
      %v655 = vunpack.c.l.b16 %v269
      %v656 = vunpack.c.l.b16 %v270
      %v657 = vunpack.c.l.b16 %v271
      %v658 = vunpack.c.l.b16 %v272
      %v659 = vunpack.c.l.b16 %v273
      %v660 = vunpack.c.l.b16 %v274
      %v661 = vunpack.c.l.b16 %v275
      %v662 = vunpack.c.l.b16 %v276
      %v663 = vunpack.c.l.b16 %v277
      %v664 = vunpack.c.l.b16 %v278
      %v665 = vunpack.c.l.b16 %v279
      %v666 = vunpack.c.l.b16 %v280
      %v667 = vunpack.c.l.b16 %v281
      %v668 = vunpack.c.l.b16 %v282
      %v669 = vunpack.c.l.b16 %v283
      %v670 = vunpack.c.l.b16 %v284
      %v671 = vunpack.c.l.b16 %v285
      %v672 = vunpack.c.l.b16 %v286
      %v673 = vunpack.c.l.b16 %v287
      %v674 = vunpack.c.l.b16 %v288
      %v675 = vunpack.c.l.b16 %v289
      %v676 = vunpack.c.l.b16 %v290
      %v677 = vunpack.c.l.b16 %v291
      %v678 = vunpack.c.l.b16 %v292
      %v679 = vunpack.c.l.b16 %v293
      %v680 = vunpack.c.l.b16 %v294
      %v681 = vunpack.c.l.b16 %v295
      %v682 = vunpack.c.l.b16 %v296
      %v683 = vunpack.c.l.b16 %v297
      %v684 = vunpack.c.l.b16 %v298
      %v685 = vunpack.c.l.b16 %v299
      %v686 = vunpack.c.l.b16 %v300
      %v687 = vunpack.c.l.b16 %v301
      %v688 = vunpack.c.l.b16 %v302
      %v689 = vunpack.c.l.b16 %v303
      %v690 = vunpack.c.l.b16 %v304
      %v691 = vunpack.c.l.b16 %v305
      %v692 = vunpack.c.l.b16 %v306
      %v693 = vunpack.c.l.b16 %v307
      %v694 = vunpack.c.l.b16 %v308
      %v695 = vunpack.c.l.b16 %v309
      %v696 = vunpack.c.l.b16 %v310
      %v697 = vunpack.c.l.b16 %v311
      %v698 = vunpack.c.l.b16 %v312
      %v699 = vunpack.c.l.b16 %v313
      %v700 = vunpack.c.l.b16 %v314
      %v701 = vunpack.c.l.b16 %v315
      %v702 = vunpack.c.l.b16 %v316
      %v703 = vunpack.c.l.b16 %v317
      %v704 = vunpack.c.l.b16 %v318
      %v705 = vunpack.c.l.b16 %v319
      %v706 = vunpack.c.l.b16 %v320
      %v707 = vunpack.c.l.b16 %v321
      %v708 = vunpack.c.l.b16 %v322
      %v709 = vunpack.c.l.b16 %v323
      %v710 = vunpack.c.l.b16 %v324
      %v711 = vunpack.c.l.b16 %v325
      %v712 = vunpack.c.l.b16 %v326
      %v713 = vunpack.c.l.b16 %v327
      %v714 = vunpack.c.l.b16 %v328
      %v715 = vunpack.c.l.b16 %v329
      %v716 = vunpack.c.l.b16 %v330
      %v717 = vunpack.c.l.b16 %v331
      %v718 = vunpack.c.l.b16 %v332
      %v719 = vunpack.c.l.b16 %v333
      %v720 = vunpack.c.l.b16 %v334
      %v721 = vunpack.c.l.b16 %v335
      %v722 = vunpack.c.l.b16 %v336
      %v723 = vunpack.c.l.b16 %v337
      %v724 = vunpack.c.l.b16 %v338
      %v725 = vunpack.c.l.b16 %v339
      %v726 = vunpack.c.l.b16 %v340
      %v727 = vunpack.c.l.b16 %v341
      %v728 = vunpack.c.l.b16 %v342
      %v729 = vunpack.c.l.b16 %v343
      %v730 = vunpack.c.l.b16 %v344
      %v731 = vunpack.c.l.b16 %v345
      %v732 = vunpack.c.l.b16 %v346
      %v733 = vunpack.c.l.b16 %v347
      %v734 = vunpack.c.l.b16 %v348
      %v735 = vunpack.c.l.b16 %v349
      %v736 = vunpack.c.l.b16 %v350
      %v737 = vunpack.c.l.b16 %v351
      %v738 = vpack.c.b16 %v577, %v576
      %v739 = vpack.c.b16 %v579, %v578
      %v740 = vpack.c.b16 %v581, %v580
      %v741 = vpack.c.b16 %v583, %v582
      %v742 = vpack.c.b16 %v585, %v584
      %v743 = vpack.c.b16 %v587, %v586
      %v744 = vpack.c.b16 %v589, %v588
      %v745 = vpack.c.b16 %v591, %v590
      %v746 = vpack.c.b16 %v593, %v592
      %v747 = vpack.c.b16 %v595, %v594
      %v748 = vpack.c.b16 %v597, %v596
      %v749 = vpack.c.b16 %v599, %v598
      %v750 = vpack.c.b16 %v601, %v600
      %v751 = vpack.c.b16 %v603, %v602
      %v752 = vpack.c.b16 %v605, %v604
      %v753 = vpack.c.b16 %v607, %v606
      %v754 = vpack.c.b16 %v609, %v608
      %v755 = vpack.c.b16 %v611, %v610
      %v756 = vpack.c.b16 %v613, %v612
      %v757 = vpack.c.b16 %v615, %v614
      %v758 = vpack.c.b16 %v617, %v616
      %v759 = vpack.c.b16 %v619, %v618
      %v760 = vpack.c.b16 %v621, %v620
      %v761 = vpack.c.b16 %v623, %v622
      %v762 = vpack.c.b16 %v625, %v624
      %v763 = vpack.c.b16 %v627, %v626
      %v764 = vpack.c.b16 %v629, %v628
      %v765 = vpack.c.b16 %v631, %v630
      %v766 = vpack.c.b16 %v633, %v632
      %v767 = vpack.c.b16 %v635, %v634
      %v768 = vpack.c.b16 %v637, %v636
      %v769 = vpack.c.b16 %v639, %v638
      %v770 = vpack.c.b16 %v641, %v640
      %v771 = vpack.c.b16 %v643, %v642
      %v772 = vpack.c.b16 %v645, %v644
      %v773 = vpack.c.b16 %v647, %v646
      %v774 = vpack.c.b16 %v649, %v648
      %v775 = vpack.c.b16 %v651, %v650
      %v776 = vpack.c.b16 %v653, %v652
      %v777 = vpack.c.b16 %v655, %v654
      %v778 = vpack.c.b16 %v657, %v656
      %v779 = vpack.c.b16 %v659, %v658
      %v780 = vpack.c.b16 %v661, %v660
      %v781 = vpack.c.b16 %v663, %v662
      %v782 = vpack.c.b16 %v665, %v664
      %v783 = vpack.c.b16 %v667, %v666
      %v784 = vpack.c.b16 %v669, %v668
      %v785 = vpack.c.b16 %v671, %v670
      %v786 = vpack.c.b16 %v673, %v672
      %v787 = vpack.c.b16 %v675, %v674
      %v788 = vpack.c.b16 %v677, %v676
      %v789 = vpack.c.b16 %v679, %v678
      %v790 = vpack.c.b16 %v681, %v680
      %v791 = vpack.c.b16 %v683, %v682
      %v792 = vpack.c.b16 %v685, %v684
      %v793 = vpack.c.b16 %v687, %v686
      %v794 = vpack.c.b16 %v689, %v688
      %v795 = vpack.c.b16 %v691, %v690
      %v796 = vpack.c.b16 %v693, %v692
      %v797 = vpack.c.b16 %v695, %v694
      %v798 = vpack.c.b16 %v697, %v696
      %v799 = vpack.c.b16 %v699, %v698
      %v800 = vpack.c.b16 %v701, %v700
      %v801 = vpack.c.b16 %v703, %v702
      %v802 = vpack.c.b16 %v705, %v704
      %v803 = vpack.c.b16 %v707, %v706
      %v804 = vpack.c.b16 %v709, %v708
      %v805 = vpack.c.b16 %v711, %v710
      %v806 = vpack.c.b16 %v713, %v712
      %v807 = vpack.c.b16 %v715, %v714
      %v808 = vpack.c.b16 %v717, %v716
      %v809 = vpack.c.b16 %v719, %v718
      %v810 = vpack.c.b16 %v721, %v720
      %v811 = vpack.c.b16 %v723, %v722
      %v812 = vpack.c.b16 %v725, %v724
      %v813 = vpack.c.b16 %v727, %v726
      %v814 = vpack.c.b16 %v729, %v728
      %v815 = vpack.c.b16 %v731, %v730
      %v816 = vpack.c.b16 %v733, %v732
      %v817 = vpack.c.b16 %v735, %v734
      %v818 = vpack.c.b16 %v737, %v736
      %vm900 = vcmask 130048
      %v902 = vsel %vm900, %v403, 0
      %904 = vmatprep.subr.bf16.mxu0 0
      %905 = vmatpush1.bf16.msra.mxu0 %v738
      %906 = vmatprep.subr.bf16.mxu0 0
      %907 = vmatpush1.bf16.msra.mxu0 %v739
      %908 = vmatprep.subr.bf16.mxu0 0
      %909 = vmatpush1.bf16.msra.mxu0 %v740
      %910 = vmatprep.subr.bf16.mxu0 0
      %911 = vmatpush1.bf16.msra.mxu0 %v741
      %912 = vmatprep.subr.bf16.mxu0 0
      %913 = vmatpush1.bf16.msra.mxu0 %v742
      %914 = vmatprep.subr.bf16.mxu0 0
      %915 = vmatpush1.bf16.msra.mxu0 %v743
      %916 = vmatprep.subr.bf16.mxu0 0
      %917 = vmatpush1.bf16.msra.mxu0 %v744
      %918 = vmatprep.subr.bf16.mxu0 0
      %919 = vmatpush1.bf16.msra.mxu0 %v745
      %920 = vmatprep.subr.bf16.mxu0 0
      %921 = vmatpush1.bf16.msra.mxu0 %v746
      %922 = vmatprep.subr.bf16.mxu0 0
      %923 = vmatpush1.bf16.msra.mxu0 %v747
      %924 = vmatprep.subr.bf16.mxu0 0
      %925 = vmatpush1.bf16.msra.mxu0 %v748
      %926 = vmatprep.subr.bf16.mxu0 0
      %927 = vmatpush1.bf16.msra.mxu0 %v749
      %928 = vmatprep.subr.bf16.mxu0 0
      %929 = vmatpush1.bf16.msra.mxu0 %v750
      %930 = vmatprep.subr.bf16.mxu0 0
      %931 = vmatpush1.bf16.msra.mxu0 %v751
      %932 = vmatprep.subr.bf16.mxu0 0
      %933 = vmatpush1.bf16.msra.mxu0 %v752
      %934 = vmatprep.subr.bf16.mxu0 0
      %935 = vmatpush1.bf16.msra.mxu0 %v753
      %936 = vmatprep.mubr.bf16.mxu0 %v394
      %937 = vmatmul.mubr.bf16.gmra.mrb[0].mxu0 %v393
      %v938 = vpop.f32.mrb[0].mxu0
      %v939 = vadd.f32 %v357, %v938
      %v940 = vpop.f32.mrb[0].mxu0
      %v941 = vpop.f32.mrb[0].mxu0
      %v942 = vadd.f32 %v357, %v941
      %v943 = vpop.f32.mrb[0].mxu0
      %944 = vdwg.mxu0
      %945 = vmatprep.subr.bf16.mxu0 0
      %946 = vmatpush1.bf16.msra.mxu0 %v754
      %947 = vmatprep.subr.bf16.mxu0 0
      %948 = vmatpush1.bf16.msra.mxu0 %v755
      %949 = vmatprep.subr.bf16.mxu0 0
      %950 = vmatpush1.bf16.msra.mxu0 %v756
      %951 = vmatprep.subr.bf16.mxu0 0
      %952 = vmatpush1.bf16.msra.mxu0 %v757
      %953 = vmatprep.subr.bf16.mxu0 0
      %954 = vmatpush1.bf16.msra.mxu0 %v758
      %955 = vmatprep.subr.bf16.mxu0 0
      %956 = vmatpush1.bf16.msra.mxu0 %v759
      %957 = vmatprep.subr.bf16.mxu0 0
      %958 = vmatpush1.bf16.msra.mxu0 %v760
      %959 = vmatprep.subr.bf16.mxu0 0
      %960 = vmatpush1.bf16.msra.mxu0 %v761
      %961 = vmatprep.subr.bf16.mxu0 0
      %962 = vmatpush1.bf16.msra.mxu0 %v762
      %963 = vmatprep.subr.bf16.mxu0 0
      %964 = vmatpush1.bf16.msra.mxu0 %v763
      %965 = vmatprep.subr.bf16.mxu0 0
      %966 = vmatpush1.bf16.msra.mxu0 %v764
      %967 = vmatprep.subr.bf16.mxu0 0
      %968 = vmatpush1.bf16.msra.mxu0 %v765
      %969 = vmatprep.subr.bf16.mxu0 0
      %970 = vmatpush1.bf16.msra.mxu0 %v766
      %971 = vmatprep.subr.bf16.mxu0 0
      %972 = vmatpush1.bf16.msra.mxu0 %v767
      %973 = vmatprep.subr.bf16.mxu0 0
      %974 = vmatpush1.bf16.msra.mxu0 %v768
      %975 = vmatprep.subr.bf16.mxu0 0
      %976 = vmatpush1.bf16.msra.mxu0 %v769
      %977 = vmatprep.mubr.bf16.mxu0 %v396
      %978 = vmatmul.mubr.bf16.gmra.mrb[0].mxu0 %v395
      %v979 = vpop.f32.mrb[0].mxu0
      %v980 = vadd.f32 %v939, %v979
      %v981 = vpop.f32.mrb[0].mxu0
      %v982 = vpop.f32.mrb[0].mxu0
      %v983 = vadd.f32 %v942, %v982
      %v984 = vpop.f32.mrb[0].mxu0
      %985 = vdwg.mxu0
      %986 = vmatprep.subr.bf16.mxu0 0
      %987 = vmatpush1.bf16.msra.mxu0 %v770
      %988 = vmatprep.subr.bf16.mxu0 0
      %989 = vmatpush1.bf16.msra.mxu0 %v771
      %990 = vmatprep.subr.bf16.mxu0 0
      %991 = vmatpush1.bf16.msra.mxu0 %v772
      %992 = vmatprep.subr.bf16.mxu0 0
      %993 = vmatpush1.bf16.msra.mxu0 %v773
      %994 = vmatprep.subr.bf16.mxu0 0
      %995 = vmatpush1.bf16.msra.mxu0 %v774
      %996 = vmatprep.subr.bf16.mxu0 0
      %997 = vmatpush1.bf16.msra.mxu0 %v775
      %998 = vmatprep.subr.bf16.mxu0 0
      %999 = vmatpush1.bf16.msra.mxu0 %v776
      %1000 = vmatprep.subr.bf16.mxu0 0
      %1001 = vmatpush1.bf16.msra.mxu0 %v777
      %1002 = vmatprep.subr.bf16.mxu0 0
      %1003 = vmatpush1.bf16.msra.mxu0 %v778
      %1004 = vmatprep.subr.bf16.mxu0 0
      %1005 = vmatpush1.bf16.msra.mxu0 %v779
      %1006 = vmatprep.subr.bf16.mxu0 0
      %1007 = vmatpush1.bf16.msra.mxu0 %v780
      %1008 = vmatprep.subr.bf16.mxu0 0
      %1009 = vmatpush1.bf16.msra.mxu0 %v781
      %1010 = vmatprep.subr.bf16.mxu0 0
      %1011 = vmatpush1.bf16.msra.mxu0 %v782
      %1012 = vmatprep.subr.bf16.mxu0 0
      %1013 = vmatpush1.bf16.msra.mxu0 %v783
      %1014 = vmatprep.subr.bf16.mxu0 0
      %1015 = vmatpush1.bf16.msra.mxu0 %v784
      %1016 = vmatprep.subr.bf16.mxu0 0
      %1017 = vmatpush1.bf16.msra.mxu0 %v785
      %1018 = vmatprep.mubr.bf16.mxu0 %v398
      %1019 = vmatmul.mubr.bf16.gmra.mrb[0].mxu0 %v397
      %v1020 = vpop.f32.mrb[0].mxu0
      %v1021 = vadd.f32 %v980, %v1020
      %v1022 = vpop.f32.mrb[0].mxu0
      %v1023 = vpop.f32.mrb[0].mxu0
      %v1024 = vadd.f32 %v983, %v1023
      %v1025 = vpop.f32.mrb[0].mxu0
      %1026 = vdwg.mxu0
      %1027 = vmatprep.subr.bf16.mxu0 0
      %1028 = vmatpush1.bf16.msra.mxu0 %v786
      %1029 = vmatprep.subr.bf16.mxu0 0
      %1030 = vmatpush1.bf16.msra.mxu0 %v787
      %1031 = vmatprep.subr.bf16.mxu0 0
      %1032 = vmatpush1.bf16.msra.mxu0 %v788
      %1033 = vmatprep.subr.bf16.mxu0 0
      %1034 = vmatpush1.bf16.msra.mxu0 %v789
      %1035 = vmatprep.subr.bf16.mxu0 0
      %1036 = vmatpush1.bf16.msra.mxu0 %v790
      %1037 = vmatprep.subr.bf16.mxu0 0
      %1038 = vmatpush1.bf16.msra.mxu0 %v791
      %1039 = vmatprep.subr.bf16.mxu0 0
      %1040 = vmatpush1.bf16.msra.mxu0 %v792
      %1041 = vmatprep.subr.bf16.mxu0 0
      %1042 = vmatpush1.bf16.msra.mxu0 %v793
      %1043 = vmatprep.subr.bf16.mxu0 0
      %1044 = vmatpush1.bf16.msra.mxu0 %v794
      %1045 = vmatprep.subr.bf16.mxu0 0
      %1046 = vmatpush1.bf16.msra.mxu0 %v795
      %1047 = vmatprep.subr.bf16.mxu0 0
      %1048 = vmatpush1.bf16.msra.mxu0 %v796
      %1049 = vmatprep.subr.bf16.mxu0 0
      %1050 = vmatpush1.bf16.msra.mxu0 %v797
      %1051 = vmatprep.subr.bf16.mxu0 0
      %1052 = vmatpush1.bf16.msra.mxu0 %v798
      %1053 = vmatprep.subr.bf16.mxu0 0
      %1054 = vmatpush1.bf16.msra.mxu0 %v799
      %1055 = vmatprep.subr.bf16.mxu0 0
      %1056 = vmatpush1.bf16.msra.mxu0 %v800
      %1057 = vmatprep.subr.bf16.mxu0 0
      %1058 = vmatpush1.bf16.msra.mxu0 %v801
      %1059 = vmatprep.mubr.bf16.mxu0 %v400
      %1060 = vmatmul.mubr.bf16.gmra.mrb[0].mxu0 %v399
      %v1061 = vpop.f32.mrb[0].mxu0
      %v1062 = vadd.f32 %v1021, %v1061
      %v1063 = vpop.f32.mrb[0].mxu0
      %v1064 = vpop.f32.mrb[0].mxu0
      %v1065 = vadd.f32 %v1024, %v1064
      %v1066 = vpop.f32.mrb[0].mxu0
      %1067 = vdwg.mxu0
      %1068 = vmatprep.subr.bf16.mxu0 0
      %1069 = vmatpush1.bf16.msra.mxu0 %v802
      %1070 = vmatprep.subr.bf16.mxu0 0
      %1071 = vmatpush1.bf16.msra.mxu0 %v803
      %1072 = vmatprep.subr.bf16.mxu0 0
      %1073 = vmatpush1.bf16.msra.mxu0 %v804
      %1074 = vmatprep.subr.bf16.mxu0 0
      %1075 = vmatpush1.bf16.msra.mxu0 %v805
      %1076 = vmatprep.subr.bf16.mxu0 0
      %1077 = vmatpush1.bf16.msra.mxu0 %v806
      %1078 = vmatprep.subr.bf16.mxu0 0
      %1079 = vmatpush1.bf16.msra.mxu0 %v807
      %1080 = vmatprep.subr.bf16.mxu0 0
      %1081 = vmatpush1.bf16.msra.mxu0 %v808
      %1082 = vmatprep.subr.bf16.mxu0 0
      %1083 = vmatpush1.bf16.msra.mxu0 %v809
      %1084 = vmatprep.subr.bf16.mxu0 0
      %1085 = vmatpush1.bf16.msra.mxu0 %v810
      %1086 = vmatprep.subr.bf16.mxu0 0
      %1087 = vmatpush1.bf16.msra.mxu0 %v811
      %1088 = vmatprep.subr.bf16.mxu0 0
      %1089 = vmatpush1.bf16.msra.mxu0 %v812
      %1090 = vmatprep.subr.bf16.mxu0 0
      %1091 = vmatpush1.bf16.msra.mxu0 %v813
      %1092 = vmatprep.subr.bf16.mxu0 0
      %1093 = vmatpush1.bf16.msra.mxu0 %v814
      %1094 = vmatprep.subr.bf16.mxu0 0
      %1095 = vmatpush1.bf16.msra.mxu0 %v815
      %1096 = vmatprep.subr.bf16.mxu0 0
      %1097 = vmatpush1.bf16.msra.mxu0 %v816
      %1098 = vmatprep.subr.bf16.mxu0 0
      %1099 = vmatpush1.bf16.msra.mxu0 %v817
      %1100 = vmatprep.mubr.bf16.mxu0 %v402
      %1101 = vmatmul.mubr.bf16.gmra.mrb[0].mxu0 %v401
      %v1102 = vpop.f32.mrb[0].mxu0
      %v1103 = vadd.f32 %v1062, %v1102
      %v1104 = vpop.f32.mrb[0].mxu0
      %v1105 = vpop.f32.mrb[0].mxu0
      %v1106 = vadd.f32 %v1065, %v1105
      %v1107 = vpop.f32.mrb[0].mxu0
      %1108 = vdwg.mxu0
      %1109 = vmatprep.subr.bf16.mxu0 0
      %1110 = vmatpush1.bf16.msra.mxu0 %v818
      %1111 = vmatprep.subr.bf16.mxu0 0
      %1112 = vmatpush1.bf16.msra.mxu0 0
      %1113 = vmatprep.subr.bf16.mxu0 0
      %1114 = vmatpush1.bf16.msra.mxu0 0
      %1115 = vmatprep.subr.bf16.mxu0 0
      %1116 = vmatpush1.bf16.msra.mxu0 0
      %1117 = vmatprep.subr.bf16.mxu0 0
      %1118 = vmatpush1.bf16.msra.mxu0 0
      %1119 = vmatprep.subr.bf16.mxu0 0
      %1120 = vmatpush1.bf16.msra.mxu0 0
      %1121 = vmatprep.subr.bf16.mxu0 0
      %1122 = vmatpush1.bf16.msra.mxu0 0
      %1123 = vmatprep.subr.bf16.mxu0 0
      %1124 = vmatpush1.bf16.msra.mxu0 0
      %1125 = vmatprep.subr.bf16.mxu0 0
      %1126 = vmatpush1.bf16.msra.mxu0 0
      %1127 = vmatprep.subr.bf16.mxu0 0
      %1128 = vmatpush1.bf16.msra.mxu0 0
      %1129 = vmatprep.subr.bf16.mxu0 0
      %1130 = vmatpush1.bf16.msra.mxu0 0
      %1131 = vmatprep.subr.bf16.mxu0 0
      %1132 = vmatpush1.bf16.msra.mxu0 0
      %1133 = vmatprep.subr.bf16.mxu0 0
      %1134 = vmatpush1.bf16.msra.mxu0 0
      %1135 = vmatprep.subr.bf16.mxu0 0
      %1136 = vmatpush1.bf16.msra.mxu0 0
      %1137 = vmatprep.subr.bf16.mxu0 0
      %1138 = vmatpush1.bf16.msra.mxu0 0
      %1139 = vmatprep.subr.bf16.mxu0 0
      %1140 = vmatpush1.bf16.msra.mxu0 0
      %1141 = vmatprep.mubr.bf16.mxu0 0
      %1142 = vmatmul.mubr.bf16.gmra.mrb[0].mxu0 %v902
      %v1143 = vpop.f32.mrb[0].mxu0
      %v1144 = vadd.f32 %v1103, %v1143
      %v1145 = vpop.f32.mrb[0].mxu0
      %v1146 = vpop.f32.mrb[0].mxu0
      %v1147 = vadd.f32 %v1106, %v1146
      %v1148 = vpop.f32.mrb[0].mxu0
      %1149 = vdwg.mxu0
      %v1150 = vpack.c.bf16 %v1147, %v1144
      %v1152 = vunpack.c.l.b16 %v1150
      %v1153 = vunpack.c.h.b16 %v1150
      %v1154 = vpack.c.b16 %v1152, %v1152
      %v1155 = vpack.c.b16 %v1153, %v1153
      %1158 = vst [vmem:[%s175] sm:$0xf] %v1154
      %1159 = vst [vmem:[%s175 + $0x4] sm:$0xf] %v1155
      %s1160 = smul.u32 2, %s14
      %p1161 = scmp.lt.s32.totalorder %s1160, 3
      %s1162 = scalar_select %p1161, %s1160, 3
      %s1163 = smul.addr %s1162, 4
      %s1164 = scalar_lea.vmem %s3, %s1163
      // Predicated region
      $region33: #{detector_forward.1} parent=31 // pred_check
        %p1165 = pneg %p100
      $region34: #{detector_forward.1} parent=31 // pred_check_branch
        %1167 = sbr.rel (%p1165) target = $region36
      $region35: #{detector_forward.1} parent=31 // pred_region
        %s1168 = smul.u32 2, %s14
      $region36: #{detector_forward.1} parent=31 // pred_fallthru
        _
    $region32: #{detector_forward.1} parent=5 // pred_fallthru
      _
    %p1169 = scmp.le.s32.totalorder 2, %s9
    // Predicated region
    $region37: #{detector_forward.1} parent=5 // pred_check
      %p1170 = pneg %p1169
    $region38: #{detector_forward.1} parent=5 // pred_check_branch
      %1172 = sbr.rel (%p1170) target = $region40
    $region39: #{detector_forward.1} parent=5 // pred_region
      %s1173 = ssub.s32 %s9, 2
      // Predicated region
      $region41: #{detector_forward.1} parent=39 // pred_check
        %p1174 = pneg %p106
      $region42: #{detector_forward.1} parent=39 // pred_check_branch
        %1176 = sbr.rel (%p1174) target = $region44
      $region43: #{detector_forward.1} parent=39 // pred_region
        %s1177 = smul.u32 2, %s15
        %p1178 = scmp.lt.s32.totalorder %s1177, 3
        %s1179 = scalar_select %p1178, %s1177, 3
        %s1180 = smul.addr %s1179, 4
        %s1181 = scalar_lea.vmem %s3, %s1180
      $region44: #{detector_forward.1} parent=39 // pred_fallthru
        _
    $region40: #{detector_forward.1} parent=5 // pred_fallthru
      _
  $region6: #{detector_forward.1} parent=0 // loop_footer
    %s13 = sadd.s32 1, %s9
  $region7: #{detector_forward.1} parent=0 // loop_footer_branch
    %8 = sbr.rel target = $region3
  $region8: #{detector_forward.1} parent=0 // loop_exit
    _

</llo_original>
